<compile_context>
chip_gen: v6e
topology: v6e:2x2x1
jax: 0.10.0
libtpu: 0.0.40
codegen_flags: <defaults>
</compile_context>

<pallas_src>
import math
import numpy as np
import jax
import jax.numpy as jnp
from jax import lax
from jax.experimental import pallas as pl
from jax.experimental.pallas import tpu as pltpu

# --- synthetic config (bert_type='tiny' -> emb_dim=128) ---
B = 2          # batch
NC = 8         # number of categorical columns   (_config['nc'])
NN = 8         # number of numerical columns     (_config['nn'])
NTEXT = 16     # text length = PE max_len        (_config['ntext'])
D = 128        # emb_dim ('tiny')
CAT_VOCAB = 32
TEXT_VOCAB = 64
S_OUT = NC + NN + NTEXT          # 32 output tokens per batch element
R_TOTAL = B * S_OUT              # 64 output rows total (one flat slab)

# --- concatenated-table row offsets (all slot ranges are pairwise disjoint) ---
CAT_OFF = 0
TEXT_OFF = CAT_OFF + CAT_VOCAB           # 32
TT_OFF = TEXT_OFF + TEXT_VOCAB           # 96
NULL_OFF = TT_OFF + 2                    # 98
CATPOS_OFF = NULL_OFF + 2                # 100
NUMPOS_OFF = CATPOS_OFF + NC             # 108
NUMEMB_OFF = NUMPOS_OFF + NN             # 116
PE_OFF = NUMEMB_OFF + NN                 # 124
ZERO_OFF = PE_OFF + NTEXT                # 140 -> zero row (no-op add for text null slot)
VTOT = 256                               # pad contraction dim to full MXU width


def input2emb_kernel(cols_ref, w0_ref, table_ref, out_ref):
    """cols: (R, 4) int32 column indices, w0: (R, 1) f32 slot-0 weights, table: (VTOT, D)."""
    iota = lax.broadcasted_iota(jnp.int32, (R_TOTAL, VTOT), 1)
    cols = cols_ref[...]                                         # (R, 4)
    # Slots 1..3 (pos / token-type / null) have weight 1 and hit disjoint table ranges:
    # OR-fuse their one-hot masks and cast to f32 exactly once.
    unit = ((cols[:, 1:2] == iota) |
            (cols[:, 2:3] == iota) |
            (cols[:, 3:4] == iota))
    # Slot 0 (cat-id / text-id / num-emb row) carries a per-row weight
    # (1.0, or the numeric value -> folds value*num_emb into the same MXU matmul).
    m = unit.astype(jnp.float32) + jnp.where(cols[:, 0:1] == iota, w0_ref[...], 0.0)
    # One MXU matmul replaces every gather and every additive term.
    out_ref[...] = jnp.dot(m, table_ref[...], preferred_element_type=jnp.float32)


def mmtg_input2emb(text_ids, text_type, cat_ids, cat_null, cat_type,
                   num_vals, num_null, num_type, params):
    # ---------- wrapper-side packing (layout plumbing only, no compute hoisting) ----------
    table = jnp.concatenate(
        [params['w_cat'], params['w_text'], params['w_tt'], params['w_null'],
         params['cat_pos'], params['num_pos'], params['num_emb'], params['pe'],
         jnp.zeros((VTOT - ZERO_OFF, D), jnp.float32)], axis=0)           # (VTOT, D)

    ar_nc = jnp.arange(NC, dtype=jnp.int32)
    ar_nn = jnp.arange(NN, dtype=jnp.int32)
    ar_nt = jnp.arange(NTEXT, dtype=jnp.int32)

    # row order per batch element: [cat (NC), num (NN), text (NTEXT)]  (matches torch.cat)
    slot0 = jnp.concatenate(
        [CAT_OFF + cat_ids,
         jnp.broadcast_to(NUMEMB_OFF + ar_nn, (B, NN)),
         TEXT_OFF + text_ids], axis=1)
    slot1 = jnp.concatenate(
        [jnp.broadcast_to(CATPOS_OFF + ar_nc, (B, NC)),
         jnp.broadcast_to(NUMPOS_OFF + ar_nn, (B, NN)),
         jnp.broadcast_to(PE_OFF + ar_nt, (B, NTEXT))], axis=1)
    slot2 = jnp.concatenate(
        [TT_OFF + cat_type, TT_OFF + num_type, TT_OFF + text_type], axis=1)
    slot3 = jnp.concatenate(
        [NULL_OFF + cat_null, NULL_OFF + num_null,
         jnp.full((B, NTEXT), ZERO_OFF, jnp.int32)], axis=1)
    cols = jnp.stack([slot0, slot1, slot2, slot3], axis=-1).astype(jnp.int32)
    cols = cols.reshape(R_TOTAL, 4)                                       # (R, 4)

    w0 = jnp.concatenate(
        [jnp.ones((B, NC), jnp.float32),
         num_vals.astype(jnp.float32),           # fold value*num_emb into the matmul
         jnp.ones((B, NTEXT), jnp.float32)], axis=1).reshape(R_TOTAL, 1)  # (R, 1)

    # ---------- single-step pallas_call: 3 operands, one dense (64, 128) output slab ----------
    out2d = pl.pallas_call(
        input2emb_kernel,
        out_shape=jax.ShapeDtypeStruct((R_TOTAL, D), jnp.float32),
        grid_spec=pltpu.PrefetchScalarGridSpec(
            num_scalar_prefetch=0,
            grid=(1,),
            in_specs=[pl.BlockSpec((R_TOTAL, 4), lambda i: (0, 0)),
                      pl.BlockSpec((R_TOTAL, 1), lambda i: (0, 0)),
                      pl.BlockSpec((VTOT, D), lambda i: (0, 0))],
            out_specs=pl.BlockSpec((R_TOTAL, D), lambda i: (0, 0))),
        compiler_params=pltpu.CompilerParams(dimension_semantics=("arbitrary",)),
    )(cols, w0, table)

    return out2d.reshape(B, S_OUT, D)


def ref_forward(text_ids, text_type, cat_ids, cat_null, cat_type,
                num_vals, num_null, num_type, p):
    """Pure-JAX reference matching the PyTorch forward (eval mode)."""
    text_e = p['w_text'][text_ids] + p['pe'][None] + p['w_tt'][text_type]
    cat_e = p['w_cat'][cat_ids] + p['cat_pos'][None] + p['w_tt'][cat_type] + p['w_null'][cat_null]
    num_e = (num_vals[..., None] * p['num_emb'][None]
             + p['num_pos'][None] + p['w_tt'][num_type] + p['w_null'][num_null])
    return jnp.concatenate([cat_e, num_e, text_e], axis=1)


if __name__ == "__main__":
    key = jax.random.PRNGKey(0)
    ks = jax.random.split(key, 12)

    # --- deterministic parameter init (shapes from __init__) ---
    w_text = jax.random.normal(ks[0], (TEXT_VOCAB, D), jnp.float32)
    w_text = w_text.at[0].set(0.0)                       # padding_idx=0
    w_cat = jax.random.normal(ks[1], (CAT_VOCAB, D), jnp.float32)
    w_tt = jax.random.normal(ks[2], (2, D), jnp.float32)       # token_type_emb
    w_null = jax.random.normal(ks[3], (2, D), jnp.float32)     # null_emb
    cat_pos = jax.random.normal(ks[4], (NC, D), jnp.float32)   # cat_pos_emb
    num_pos = jax.random.normal(ks[5], (NN, D), jnp.float32)   # num_pos_emb
    num_emb = jax.random.normal(ks[6], (NN, D), jnp.float32)   # num_emb (sep_numemb)

    # sinusoidal positional-encoding table (PositionalEncoding.__init__)
    position = np.arange(NTEXT, dtype=np.float32)[:, None]
    div_term = np.exp(np.arange(0, D, 2, dtype=np.float32) * (-math.log(10000.0) / D))
    pe_np = np.zeros((NTEXT, D), np.float32)
    pe_np[:, 0::2] = np.sin(position * div_term)
    pe_np[:, 1::2] = np.cos(position * div_term)
    pe = jnp.asarray(pe_np)

    params = dict(w_text=w_text, w_cat=w_cat, w_tt=w_tt, w_null=w_null,
                  cat_pos=cat_pos, num_pos=num_pos, num_emb=num_emb, pe=pe)

    # --- deterministic example inputs ---
    text_ids = jax.random.randint(ks[7], (B, NTEXT), 0, TEXT_VOCAB, dtype=jnp.int32)
    text_type = jnp.ones((B, NTEXT), jnp.int32)          # text -> token type 1
    cat_ids = jax.random.randint(ks[8], (B, NC), 0, CAT_VOCAB, dtype=jnp.int32)
    cat_null = jax.random.randint(ks[9], (B, NC), 0, 2, dtype=jnp.int32)
    cat_type = jnp.zeros((B, NC), jnp.int32)             # table -> token type 0
    num_vals = jax.random.normal(ks[10], (B, NN), jnp.float32)
    num_null = jax.random.randint(ks[11], (B, NN), 0, 2, dtype=jnp.int32)
    num_type = jnp.zeros((B, NN), jnp.int32)

    fwd = jax.jit(mmtg_input2emb)
    out = fwd(text_ids, text_type, cat_ids, cat_null, cat_type,
              num_vals, num_null, num_type, params)
    out = jax.block_until_ready(out)

    ref = ref_forward(text_ids, text_type, cat_ids, cat_null, cat_type,
                      num_vals, num_null, num_type, params)
    np.testing.assert_allclose(np.asarray(out), np.asarray(ref), rtol=1e-5, atol=1e-5)

    print("KERNEL_OK")
</pallas_src>

<mosaic_0001>
module attributes {stable_mosaic.version = 11 : i64} {
  func.func @input2emb_kernel(%arg0: i32, %arg1: memref<64x4xi32, #tpu.memory_space<vmem>>, %arg2: memref<64x1xf32, #tpu.memory_space<vmem>>, %arg3: memref<256x128xf32, #tpu.memory_space<vmem>>, %arg4: memref<64x128xf32, #tpu.memory_space<vmem>>) attributes {dimension_semantics = [#tpu.dimension_semantics<arbitrary>], iteration_bounds = array<i64: 1>, scalar_prefetch = 0 : i64, scratch_operands = 0 : i64, tpu.core_type = #tpu.core_type<tc>, window_params = [{pipeline_mode = #tpu.pipeline_mode<synchronous>, transform_indices = @transform_0, window_bounds = array<i64: 64, 4>}, {pipeline_mode = #tpu.pipeline_mode<synchronous>, transform_indices = @transform_1, window_bounds = array<i64: 64, 1>}, {pipeline_mode = #tpu.pipeline_mode<synchronous>, transform_indices = @transform_2, window_bounds = array<i64: 256, 128>}, {pipeline_mode = #tpu.pipeline_mode<synchronous>, transform_indices = @transform_3, window_bounds = array<i64: 64, 128>}]} {
    %0 = tpu.iota {dimensions = array<i32: 1>} : vector<64x256xi32>
    %c0 = arith.constant 0 : index
    %c0_0 = arith.constant 0 : index
    %1 = vector.load %arg1[%c0, %c0_0] : memref<64x4xi32, #tpu.memory_space<vmem>>, vector<64x4xi32>
    %2 = vector.extract_strided_slice %1 {offsets = [0, 1], sizes = [64, 1], strides = [1, 1]} : vector<64x4xi32> to vector<64x1xi32>
    %3 = vector.broadcast %2 : vector<64x1xi32> to vector<64x256xi32>
    %4 = arith.cmpi eq, %3, %0 : vector<64x256xi32>
    %5 = vector.extract_strided_slice %1 {offsets = [0, 2], sizes = [64, 1], strides = [1, 1]} : vector<64x4xi32> to vector<64x1xi32>
    %6 = vector.broadcast %5 : vector<64x1xi32> to vector<64x256xi32>
    %7 = arith.cmpi eq, %6, %0 : vector<64x256xi32>
    %8 = arith.ori %4, %7 : vector<64x256xi1>
    %9 = vector.extract_strided_slice %1 {offsets = [0, 3], sizes = [64, 1], strides = [1, 1]} : vector<64x4xi32> to vector<64x1xi32>
    %10 = vector.broadcast %9 : vector<64x1xi32> to vector<64x256xi32>
    %11 = arith.cmpi eq, %10, %0 : vector<64x256xi32>
    %12 = arith.ori %8, %11 : vector<64x256xi1>
    %13 = arith.extui %12 : vector<64x256xi1> to vector<64x256xi32>
    %14 = arith.sitofp %13 : vector<64x256xi32> to vector<64x256xf32>
    %15 = vector.extract_strided_slice %1 {offsets = [0, 0], sizes = [64, 1], strides = [1, 1]} : vector<64x4xi32> to vector<64x1xi32>
    %16 = vector.broadcast %15 : vector<64x1xi32> to vector<64x256xi32>
    %17 = arith.cmpi eq, %16, %0 : vector<64x256xi32>
    %c0_1 = arith.constant 0 : index
    %c0_2 = arith.constant 0 : index
    %18 = vector.load %arg2[%c0_1, %c0_2] : memref<64x1xf32, #tpu.memory_space<vmem>>, vector<64x1xf32>
    %cst = arith.constant 0.000000e+00 : f32
    %19 = vector.shape_cast %18 : vector<64x1xf32> to vector<64x1xf32>
    %20 = vector.broadcast %19 : vector<64x1xf32> to vector<64x256xf32>
    %21 = vector.broadcast %cst : f32 to vector<64x256xf32>
    %22 = arith.select %17, %20, %21 : vector<64x256xi1>, vector<64x256xf32>
    %23 = arith.addf %14, %22 : vector<64x256xf32>
    %c0_3 = arith.constant 0 : index
    %c0_4 = arith.constant 0 : index
    %24 = vector.load %arg3[%c0_3, %c0_4] : memref<256x128xf32, #tpu.memory_space<vmem>>, vector<256x128xf32>
    %cst_5 = arith.constant dense<0.000000e+00> : vector<64x128xf32>
    %25 = tpu.matmul %23, %24, %cst_5 {dimension_numbers = #tpu.dot_dimension_numbers<[1], [0], [0], [1], [0, 0, 1, 1], [], []>} : vector<64x256xf32>, vector<256x128xf32>, vector<64x128xf32> -> vector<64x128xf32>
    %c0_6 = arith.constant 0 : index
    %c0_7 = arith.constant 0 : index
    %26 = vector.load %arg4[%c0_6, %c0_7] : memref<64x128xf32, #tpu.memory_space<vmem>>, vector<64x128xf32>
    tpu.vector_store %arg4[%c0_6, %c0_7], %25 {strides = array<i32>} : memref<64x128xf32, #tpu.memory_space<vmem>>, vector<64x128xf32>,
    return
  }
  func.func @transform_0(%arg0: i32) -> (i32, i32) {
    %c0_i32 = arith.constant 0 : i32
    %c0_i32_0 = arith.constant 0 : i32
    %c0_i32_1 = arith.constant 0 : i32
    return %c0_i32, %c0_i32_0 : i32, i32
  }
  func.func @transform_1(%arg0: i32) -> (i32, i32) {
    %c0_i32 = arith.constant 0 : i32
    %c0_i32_0 = arith.constant 0 : i32
    %c0_i32_1 = arith.constant 0 : i32
    return %c0_i32, %c0_i32_0 : i32, i32
  }
  func.func @transform_2(%arg0: i32) -> (i32, i32) {
    %c0_i32 = arith.constant 0 : i32
    %c0_i32_0 = arith.constant 0 : i32
    %c0_i32_1 = arith.constant 0 : i32
    return %c0_i32, %c0_i32_0 : i32, i32
  }
  func.func @transform_3(%arg0: i32) -> (i32, i32) {
    %c0_i32 = arith.constant 0 : i32
    %c0_i32_0 = arith.constant 0 : i32
    %c0_i32_1 = arith.constant 0 : i32
    return %c0_i32, %c0_i32_0 : i32, i32
  }
}

</mosaic_0001>

<llo_original>
// kernel: mmtg_input2emb.1
$region0: #{mmtg_input2emb.1}
  #allocation0 [shape = 'u32[]', space=smem, size = 0x4, offset = 0x4, fixed_abs, tag = 'smem constant byte address 0x4 - core index']
  #allocation1 [shape = 'u32[144,128]{1,0:T(1,128)}', space=vmem, size = 0x12000, scoped, tag = 'internal scratch']
  %s0 = inlined_call_operand.vmem [shape: s32[64,4], index: 0, kind: input, shape index: {}]
  %s1 = inlined_call_operand.vmem [shape: f32[64,1], index: 1, kind: input, shape index: {}]
  %s2 = inlined_call_operand.vmem [shape: f32[256,128], index: 2, kind: input, shape index: {}]
  %s3 = inlined_call_operand.hbm [shape: f32[64,128], index: 3, kind: output, shape index: {}]
  %s4 = sld [smem:[#allocation0]]
  $region22: #{mmtg_input2emb.1} parent=0
    _
  %s6 = ssub.s32 1, %s4
  %s7 = scalar_select 0, %s6, %s4
  $region1: #{mmtg_input2emb.1} parent=0
    #allocation2 [shape = 'u8[32768]{0}', space=vmem, size = 0x8000, scoped, tag = 'output window, operand 0, single buffered']
    #allocation3 [shape = 's32[1]{0}', space=sflag, size = 0x4, scoped, tag = 'scoped memory for mmtg_input2emb.1']
    %8 = vsyncpa [#allocation3], 0
    // Predicated region
    $region2: #{mmtg_input2emb.1} parent=1 // pred_check
      _
    $region3: #{mmtg_input2emb.1} parent=1 // pred_check_branch
      %10 = sbr.rel (0) target = $region5
    $region4: #{mmtg_input2emb.1} parent=1 // pred_region
      _
    $region5: #{mmtg_input2emb.1} parent=1 // pred_fallthru
      _
    // Predicated region
    $region6: #{mmtg_input2emb.1} parent=1 // pred_check
      _
    $region7: #{mmtg_input2emb.1} parent=1 // pred_check_branch
      %12 = sbr.rel (0) target = $region9
    $region8: #{mmtg_input2emb.1} parent=1 // pred_region
      _
    $region9: #{mmtg_input2emb.1} parent=1 // pred_fallthru
      _
    // Predicated region
    $region10: #{mmtg_input2emb.1} parent=1 // pred_check
      _
    $region11: #{mmtg_input2emb.1} parent=1 // pred_check_branch
      %14 = sbr.rel (0) target = $region13
    $region12: #{mmtg_input2emb.1} parent=1 // pred_region
      _
    $region13: #{mmtg_input2emb.1} parent=1 // pred_fallthru
      _
    %v15 = vlaneseq
    %v16 = vand.u32 %v15, 127
    %v17 = vadd.s32 %v16, 128
    %v18 = vld [vmem:[%s0] sm:$0xff]
    %v19 = vld [vmem:[%s0 + $0x8] sm:$0xff]
    %v20 = vld [vmem:[%s0 + $0x10] sm:$0xff]
    %v21 = vld [vmem:[%s0 + $0x18] sm:$0xff]
    %v22 = vld [vmem:[%s0 + $0x20] sm:$0xff]
    %v23 = vld [vmem:[%s0 + $0x28] sm:$0xff]
    %v24 = vld [vmem:[%s0 + $0x30] sm:$0xff]
    %v25 = vld [vmem:[%s0 + $0x38] sm:$0xff]
    %26 = vset.pattern.permute.xlu0 1
    %27 = vperm.xlu0 %26, %v18
    %v28 = vpop.permute.xlu0 %27
    %29 = vset.pattern.permute.xlu0 1
    %30 = vperm.xlu0 %29, %v19
    %v31 = vpop.permute.xlu0 %30
    %32 = vset.pattern.permute.xlu0 1
    %33 = vperm.xlu0 %32, %v20
    %v34 = vpop.permute.xlu0 %33
    %35 = vset.pattern.permute.xlu0 1
    %36 = vperm.xlu0 %35, %v21
    %v37 = vpop.permute.xlu0 %36
    %38 = vset.pattern.permute.xlu0 1
    %39 = vperm.xlu0 %38, %v22
    %v40 = vpop.permute.xlu0 %39
    %41 = vset.pattern.permute.xlu0 1
    %42 = vperm.xlu0 %41, %v23
    %v43 = vpop.permute.xlu0 %42
    %44 = vset.pattern.permute.xlu0 1
    %45 = vperm.xlu0 %44, %v24
    %v46 = vpop.permute.xlu0 %45
    %47 = vset.pattern.permute.xlu0 1
    %48 = vperm.xlu0 %47, %v25
    %v49 = vpop.permute.xlu0 %48
    %vm50 = vcmp.eq.s32.totalorder %v28, %v16
    %vm51 = vcmp.eq.s32.totalorder %v28, %v17
    %vm52 = vcmp.eq.s32.totalorder %v31, %v16
    %vm53 = vcmp.eq.s32.totalorder %v31, %v17
    %vm54 = vcmp.eq.s32.totalorder %v34, %v16
    %vm55 = vcmp.eq.s32.totalorder %v34, %v17
    %vm56 = vcmp.eq.s32.totalorder %v37, %v16
    %vm57 = vcmp.eq.s32.totalorder %v37, %v17
    %vm58 = vcmp.eq.s32.totalorder %v40, %v16
    %vm59 = vcmp.eq.s32.totalorder %v40, %v17
    %vm60 = vcmp.eq.s32.totalorder %v43, %v16
    %vm61 = vcmp.eq.s32.totalorder %v43, %v17
    %vm62 = vcmp.eq.s32.totalorder %v46, %v16
    %vm63 = vcmp.eq.s32.totalorder %v46, %v17
    %vm64 = vcmp.eq.s32.totalorder %v49, %v16
    %vm65 = vcmp.eq.s32.totalorder %v49, %v17
    %66 = vset.pattern.permute.xlu0 2
    %67 = vperm.xlu0 %66, %v18
    %v68 = vpop.permute.xlu0 %67
    %69 = vset.pattern.permute.xlu0 2
    %70 = vperm.xlu0 %69, %v19
    %v71 = vpop.permute.xlu0 %70
    %72 = vset.pattern.permute.xlu0 2
    %73 = vperm.xlu0 %72, %v20
    %v74 = vpop.permute.xlu0 %73
    %75 = vset.pattern.permute.xlu0 2
    %76 = vperm.xlu0 %75, %v21
    %v77 = vpop.permute.xlu0 %76
    %78 = vset.pattern.permute.xlu0 2
    %79 = vperm.xlu0 %78, %v22
    %v80 = vpop.permute.xlu0 %79
    %81 = vset.pattern.permute.xlu0 2
    %82 = vperm.xlu0 %81, %v23
    %v83 = vpop.permute.xlu0 %82
    %84 = vset.pattern.permute.xlu0 2
    %85 = vperm.xlu0 %84, %v24
    %v86 = vpop.permute.xlu0 %85
    %87 = vset.pattern.permute.xlu0 2
    %88 = vperm.xlu0 %87, %v25
    %v89 = vpop.permute.xlu0 %88
    %vm90 = vcmp.eq.s32.totalorder %v68, %v16
    %vm91 = vcmp.eq.s32.totalorder %v68, %v17
    %vm92 = vcmp.eq.s32.totalorder %v71, %v16
    %vm93 = vcmp.eq.s32.totalorder %v71, %v17
    %vm94 = vcmp.eq.s32.totalorder %v74, %v16
    %vm95 = vcmp.eq.s32.totalorder %v74, %v17
    %vm96 = vcmp.eq.s32.totalorder %v77, %v16
    %vm97 = vcmp.eq.s32.totalorder %v77, %v17
    %vm98 = vcmp.eq.s32.totalorder %v80, %v16
    %vm99 = vcmp.eq.s32.totalorder %v80, %v17
    %vm100 = vcmp.eq.s32.totalorder %v83, %v16
    %vm101 = vcmp.eq.s32.totalorder %v83, %v17
    %vm102 = vcmp.eq.s32.totalorder %v86, %v16
    %vm103 = vcmp.eq.s32.totalorder %v86, %v17
    %vm104 = vcmp.eq.s32.totalorder %v89, %v16
    %vm105 = vcmp.eq.s32.totalorder %v89, %v17
    %vm106 = vmor %vm50, %vm90
    %vm107 = vmor %vm51, %vm91
    %vm108 = vmor %vm52, %vm92
    %vm109 = vmor %vm53, %vm93
    %vm110 = vmor %vm54, %vm94
    %vm111 = vmor %vm55, %vm95
    %vm112 = vmor %vm56, %vm96
    %vm113 = vmor %vm57, %vm97
    %vm114 = vmor %vm58, %vm98
    %vm115 = vmor %vm59, %vm99
    %vm116 = vmor %vm60, %vm100
    %vm117 = vmor %vm61, %vm101
    %vm118 = vmor %vm62, %vm102
    %vm119 = vmor %vm63, %vm103
    %vm120 = vmor %vm64, %vm104
    %vm121 = vmor %vm65, %vm105
    %122 = vset.pattern.permute.xlu0 3
    %123 = vperm.xlu0 %122, %v18
    %v124 = vpop.permute.xlu0 %123
    %125 = vset.pattern.permute.xlu0 3
    %126 = vperm.xlu0 %125, %v19
    %v127 = vpop.permute.xlu0 %126
    %128 = vset.pattern.permute.xlu0 3
    %129 = vperm.xlu0 %128, %v20
    %v130 = vpop.permute.xlu0 %129
    %131 = vset.pattern.permute.xlu0 3
    %132 = vperm.xlu0 %131, %v21
    %v133 = vpop.permute.xlu0 %132
    %134 = vset.pattern.permute.xlu0 3
    %135 = vperm.xlu0 %134, %v22
    %v136 = vpop.permute.xlu0 %135
    %137 = vset.pattern.permute.xlu0 3
    %138 = vperm.xlu0 %137, %v23
    %v139 = vpop.permute.xlu0 %138
    %140 = vset.pattern.permute.xlu0 3
    %141 = vperm.xlu0 %140, %v24
    %v142 = vpop.permute.xlu0 %141
    %143 = vset.pattern.permute.xlu0 3
    %144 = vperm.xlu0 %143, %v25
    %v145 = vpop.permute.xlu0 %144
    %vm146 = vcmp.eq.s32.totalorder %v124, %v16
    %vm147 = vcmp.eq.s32.totalorder %v124, %v17
    %vm148 = vcmp.eq.s32.totalorder %v127, %v16
    %vm149 = vcmp.eq.s32.totalorder %v127, %v17
    %vm150 = vcmp.eq.s32.totalorder %v130, %v16
    %vm151 = vcmp.eq.s32.totalorder %v130, %v17
    %vm152 = vcmp.eq.s32.totalorder %v133, %v16
    %vm153 = vcmp.eq.s32.totalorder %v133, %v17
    %vm154 = vcmp.eq.s32.totalorder %v136, %v16
    %vm155 = vcmp.eq.s32.totalorder %v136, %v17
    %vm156 = vcmp.eq.s32.totalorder %v139, %v16
    %vm157 = vcmp.eq.s32.totalorder %v139, %v17
    %vm158 = vcmp.eq.s32.totalorder %v142, %v16
    %vm159 = vcmp.eq.s32.totalorder %v142, %v17
    %vm160 = vcmp.eq.s32.totalorder %v145, %v16
    %vm161 = vcmp.eq.s32.totalorder %v145, %v17
    %vm162 = vmor %vm106, %vm146
    %vm163 = vmor %vm107, %vm147
    %vm164 = vmor %vm108, %vm148
    %vm165 = vmor %vm109, %vm149
    %vm166 = vmor %vm110, %vm150
    %vm167 = vmor %vm111, %vm151
    %vm168 = vmor %vm112, %vm152
    %vm169 = vmor %vm113, %vm153
    %vm170 = vmor %vm114, %vm154
    %vm171 = vmor %vm115, %vm155
    %vm172 = vmor %vm116, %vm156
    %vm173 = vmor %vm117, %vm157
    %vm174 = vmor %vm118, %vm158
    %vm175 = vmor %vm119, %vm159
    %vm176 = vmor %vm120, %vm160
    %vm177 = vmor %vm121, %vm161
    %v178 = vsel %vm162, 1, 0
    %v179 = vsel %vm163, 1, 0
    %v180 = vsel %vm164, 1, 0
    %v181 = vsel %vm165, 1, 0
    %v182 = vsel %vm166, 1, 0
    %v183 = vsel %vm167, 1, 0
    %v184 = vsel %vm168, 1, 0
    %v185 = vsel %vm169, 1, 0
    %v186 = vsel %vm170, 1, 0
    %v187 = vsel %vm171, 1, 0
    %v188 = vsel %vm172, 1, 0
    %v189 = vsel %vm173, 1, 0
    %v190 = vsel %vm174, 1, 0
    %v191 = vsel %vm175, 1, 0
    %v192 = vsel %vm176, 1, 0
    %v193 = vsel %vm177, 1, 0
    %v194 = vcvt.s32.f32 %v178
    %v195 = vcvt.s32.f32 %v179
    %v196 = vcvt.s32.f32 %v180
    %v197 = vcvt.s32.f32 %v181
    %v198 = vcvt.s32.f32 %v182
    %v199 = vcvt.s32.f32 %v183
    %v200 = vcvt.s32.f32 %v184
    %v201 = vcvt.s32.f32 %v185
    %v202 = vcvt.s32.f32 %v186
    %v203 = vcvt.s32.f32 %v187
    %v204 = vcvt.s32.f32 %v188
    %v205 = vcvt.s32.f32 %v189
    %v206 = vcvt.s32.f32 %v190
    %v207 = vcvt.s32.f32 %v191
    %v208 = vcvt.s32.f32 %v192
    %v209 = vcvt.s32.f32 %v193
    %210 = vset.pattern.permute.xlu0 0
    %211 = vperm.xlu0 %210, %v18
    %v212 = vpop.permute.xlu0 %211
    %213 = vset.pattern.permute.xlu0 0
    %214 = vperm.xlu0 %213, %v19
    %v215 = vpop.permute.xlu0 %214
    %216 = vset.pattern.permute.xlu0 0
    %217 = vperm.xlu0 %216, %v20
    %v218 = vpop.permute.xlu0 %217
    %219 = vset.pattern.permute.xlu0 0
    %220 = vperm.xlu0 %219, %v21
    %v221 = vpop.permute.xlu0 %220
    %222 = vset.pattern.permute.xlu0 0
    %223 = vperm.xlu0 %222, %v22
    %v224 = vpop.permute.xlu0 %223
    %225 = vset.pattern.permute.xlu0 0
    %226 = vperm.xlu0 %225, %v23
    %v227 = vpop.permute.xlu0 %226
    %228 = vset.pattern.permute.xlu0 0
    %229 = vperm.xlu0 %228, %v24
    %v230 = vpop.permute.xlu0 %229
    %231 = vset.pattern.permute.xlu0 0
    %232 = vperm.xlu0 %231, %v25
    %v233 = vpop.permute.xlu0 %232
    %vm234 = vcmp.eq.s32.totalorder %v212, %v16
    %vm235 = vcmp.eq.s32.totalorder %v212, %v17
    %vm236 = vcmp.eq.s32.totalorder %v215, %v16
    %vm237 = vcmp.eq.s32.totalorder %v215, %v17
    %vm238 = vcmp.eq.s32.totalorder %v218, %v16
    %vm239 = vcmp.eq.s32.totalorder %v218, %v17
    %vm240 = vcmp.eq.s32.totalorder %v221, %v16
    %vm241 = vcmp.eq.s32.totalorder %v221, %v17
    %vm242 = vcmp.eq.s32.totalorder %v224, %v16
    %vm243 = vcmp.eq.s32.totalorder %v224, %v17
    %vm244 = vcmp.eq.s32.totalorder %v227, %v16
    %vm245 = vcmp.eq.s32.totalorder %v227, %v17
    %vm246 = vcmp.eq.s32.totalorder %v230, %v16
    %vm247 = vcmp.eq.s32.totalorder %v230, %v17
    %vm248 = vcmp.eq.s32.totalorder %v233, %v16
    %vm249 = vcmp.eq.s32.totalorder %v233, %v17
    %v250 = vld [vmem:[%s1] sm:$0xff]
    %v251 = vld [vmem:[%s1 + $0x8] sm:$0xff]
    %v252 = vld [vmem:[%s1 + $0x10] sm:$0xff]
    %v253 = vld [vmem:[%s1 + $0x18] sm:$0xff]
    %v254 = vld [vmem:[%s1 + $0x20] sm:$0xff]
    %v255 = vld [vmem:[%s1 + $0x28] sm:$0xff]
    %v256 = vld [vmem:[%s1 + $0x30] sm:$0xff]
    %v257 = vld [vmem:[%s1 + $0x38] sm:$0xff]
    %259 = vset.pattern.permute.xlu0 0
    %260 = vperm.xlu0 %259, %v250
    %v261 = vpop.permute.xlu0 %260
    %264 = vset.pattern.permute.xlu0 0
    %265 = vperm.xlu0 %264, %v251
    %v266 = vpop.permute.xlu0 %265
    %269 = vset.pattern.permute.xlu0 0
    %270 = vperm.xlu0 %269, %v252
    %v271 = vpop.permute.xlu0 %270
    %274 = vset.pattern.permute.xlu0 0
    %275 = vperm.xlu0 %274, %v253
    %v276 = vpop.permute.xlu0 %275
    %279 = vset.pattern.permute.xlu0 0
    %280 = vperm.xlu0 %279, %v254
    %v281 = vpop.permute.xlu0 %280
    %284 = vset.pattern.permute.xlu0 0
    %285 = vperm.xlu0 %284, %v255
    %v286 = vpop.permute.xlu0 %285
    %289 = vset.pattern.permute.xlu0 0
    %290 = vperm.xlu0 %289, %v256
    %v291 = vpop.permute.xlu0 %290
    %294 = vset.pattern.permute.xlu0 0
    %295 = vperm.xlu0 %294, %v257
    %v296 = vpop.permute.xlu0 %295
    %v298 = vsel %vm234, %v261, 0.0
    %v299 = vsel %vm235, %v261, 0.0
    %v300 = vsel %vm236, %v266, 0.0
    %v301 = vsel %vm237, %v266, 0.0
    %v302 = vsel %vm238, %v271, 0.0
    %v303 = vsel %vm239, %v271, 0.0
    %v304 = vsel %vm240, %v276, 0.0
    %v305 = vsel %vm241, %v276, 0.0
    %v306 = vsel %vm242, %v281, 0.0
    %v307 = vsel %vm243, %v281, 0.0
    %v308 = vsel %vm244, %v286, 0.0
    %v309 = vsel %vm245, %v286, 0.0
    %v310 = vsel %vm246, %v291, 0.0
    %v311 = vsel %vm247, %v291, 0.0
    %v312 = vsel %vm248, %v296, 0.0
    %v313 = vsel %vm249, %v296, 0.0
    %v314 = vadd.f32 %v194, %v298
    %v315 = vadd.f32 %v195, %v299
    %v316 = vadd.f32 %v196, %v300
    %v317 = vadd.f32 %v197, %v301
    %v318 = vadd.f32 %v198, %v302
    %v319 = vadd.f32 %v199, %v303
    %v320 = vadd.f32 %v200, %v304
    %v321 = vadd.f32 %v201, %v305
    %v322 = vadd.f32 %v202, %v306
    %v323 = vadd.f32 %v203, %v307
    %v324 = vadd.f32 %v204, %v308
    %v325 = vadd.f32 %v205, %v309
    %v326 = vadd.f32 %v206, %v310
    %v327 = vadd.f32 %v207, %v311
    %v328 = vadd.f32 %v208, %v312
    %v329 = vadd.f32 %v209, %v313
    %v330 = vld [vmem:[%s2] sm:$0xff]
    %v331 = vld [vmem:[%s2 + $0x8] sm:$0xff]
    %v332 = vld [vmem:[%s2 + $0x10] sm:$0xff]
    %v333 = vld [vmem:[%s2 + $0x18] sm:$0xff]
    %v334 = vld [vmem:[%s2 + $0x20] sm:$0xff]
    %v335 = vld [vmem:[%s2 + $0x28] sm:$0xff]
    %v336 = vld [vmem:[%s2 + $0x30] sm:$0xff]
    %v337 = vld [vmem:[%s2 + $0x38] sm:$0xff]
    %v338 = vld [vmem:[%s2 + $0x40] sm:$0xff]
    %v339 = vld [vmem:[%s2 + $0x48] sm:$0xff]
    %v340 = vld [vmem:[%s2 + $0x50] sm:$0xff]
    %v341 = vld [vmem:[%s2 + $0x58] sm:$0xff]
    %v342 = vld [vmem:[%s2 + $0x60] sm:$0xff]
    %v343 = vld [vmem:[%s2 + $0x68] sm:$0xff]
    %v344 = vld [vmem:[%s2 + $0x70] sm:$0xff]
    %v345 = vld [vmem:[%s2 + $0x78] sm:$0xff]
    %v346 = vld [vmem:[%s2 + $0x80] sm:$0xff]
    %v347 = vld [vmem:[%s2 + $0x88] sm:$0xff]
    %v348 = vld [vmem:[%s2 + $0x90] sm:$0xff]
    %v349 = vld [vmem:[%s2 + $0x98] sm:$0xff]
    %v350 = vld [vmem:[%s2 + $0xa0] sm:$0xff]
    %v351 = vld [vmem:[%s2 + $0xa8] sm:$0xff]
    %v352 = vld [vmem:[%s2 + $0xb0] sm:$0xff]
    %v353 = vld [vmem:[%s2 + $0xb8] sm:$0xff]
    %v354 = vld [vmem:[%s2 + $0xc0] sm:$0xff]
    %v355 = vld [vmem:[%s2 + $0xc8] sm:$0xff]
    %v356 = vld [vmem:[%s2 + $0xd0] sm:$0xff]
    %v357 = vld [vmem:[%s2 + $0xd8] sm:$0xff]
    %v358 = vld [vmem:[%s2 + $0xe0] sm:$0xff]
    %v359 = vld [vmem:[%s2 + $0xe8] sm:$0xff]
    %v360 = vld [vmem:[%s2 + $0xf0] sm:$0xff]
    %v361 = vld [vmem:[%s2 + $0xf8] sm:$0xff]
    %362 = vmatprep.subr.mxu0 0.0
    %363 = vmatpush1.msra.mxu0 %v345
    %364 = vmatprep.subr.mxu0 0.0
    %365 = vmatpush1.msra.mxu0 %v344
    %366 = vmatprep.subr.mxu0 0.0
    %367 = vmatpush1.msra.mxu0 %v343
    %368 = vmatprep.subr.mxu0 0.0
    %369 = vmatpush1.msra.mxu0 %v342
    %370 = vmatprep.subr.mxu0 0.0
    %371 = vmatpush1.msra.mxu0 %v341
    %372 = vmatprep.subr.mxu0 0.0
    %373 = vmatpush1.msra.mxu0 %v340
    %374 = vmatprep.subr.mxu0 0.0
    %375 = vmatpush1.msra.mxu0 %v339
    %376 = vmatprep.subr.mxu0 0.0
    %377 = vmatpush1.msra.mxu0 %v338
    %378 = vmatprep.subr.mxu0 0.0
    %379 = vmatpush1.msra.mxu0 %v337
    %380 = vmatprep.subr.mxu0 0.0
    %381 = vmatpush1.msra.mxu0 %v336
    %382 = vmatprep.subr.mxu0 0.0
    %383 = vmatpush1.msra.mxu0 %v335
    %384 = vmatprep.subr.mxu0 0.0
    %385 = vmatpush1.msra.mxu0 %v334
    %386 = vmatprep.subr.mxu0 0.0
    %387 = vmatpush1.msra.mxu0 %v333
    %388 = vmatprep.subr.mxu0 0.0
    %389 = vmatpush1.msra.mxu0 %v332
    %390 = vmatprep.subr.mxu0 0.0
    %391 = vmatpush1.msra.mxu0 %v331
    %392 = vmatprep.subr.mxu0 0.0
    %393 = vmatpush1.msra.mxu0 %v330
    %394 = vmatprep.subr.mxu0 0.0
    %395 = vmatpush2.msra.mxu0 %v361
    %396 = vmatprep.subr.mxu0 0.0
    %397 = vmatpush2.msra.mxu0 %v360
    %398 = vmatprep.subr.mxu0 0.0
    %399 = vmatpush2.msra.mxu0 %v359
    %400 = vmatprep.subr.mxu0 0.0
    %401 = vmatpush2.msra.mxu0 %v358
    %402 = vmatprep.subr.mxu0 0.0
    %403 = vmatpush2.msra.mxu0 %v357
    %404 = vmatprep.subr.mxu0 0.0
    %405 = vmatpush2.msra.mxu0 %v356
    %406 = vmatprep.subr.mxu0 0.0
    %407 = vmatpush2.msra.mxu0 %v355
    %408 = vmatprep.subr.mxu0 0.0
    %409 = vmatpush2.msra.mxu0 %v354
    %410 = vmatprep.subr.mxu0 0.0
    %411 = vmatpush2.msra.mxu0 %v353
    %412 = vmatprep.subr.mxu0 0.0
    %413 = vmatpush2.msra.mxu0 %v352
    %414 = vmatprep.subr.mxu0 0.0
    %415 = vmatpush2.msra.mxu0 %v351
    %416 = vmatprep.subr.mxu0 0.0
    %417 = vmatpush2.msra.mxu0 %v350
    %418 = vmatprep.subr.mxu0 0.0
    %419 = vmatpush2.msra.mxu0 %v349
    %420 = vmatprep.subr.mxu0 0.0
    %421 = vmatpush2.msra.mxu0 %v348
    %422 = vmatprep.subr.mxu0 0.0
    %423 = vmatpush2.msra.mxu0 %v347
    %424 = vmatprep.subr.mxu0 0.0
    %425 = vmatpush2.msra.mxu0 %v346
    %426 = vmatprep.mubr.f32.mxu0 %v315
    %427 = vmatmul.mubr.f32.gmra.mxu0 %v314
    %v428 = vpop.f32.mrf.mxu0
    %v429 = vadd.f32 0.0, %v428
    %v430 = vpop.f32.mrf.mxu0
    %431 = vmatprep.mubr.f32.mxu0 %v317
    %432 = vmatmul.mubr.f32.gmra.mxu0 %v316
    %v433 = vpop.f32.mrf.mxu0
    %v434 = vadd.f32 0.0, %v433
    %v435 = vpop.f32.mrf.mxu0
    %436 = vmatprep.mubr.f32.mxu0 %v319
    %437 = vmatmul.mubr.f32.gmra.mxu0 %v318
    %v438 = vpop.f32.mrf.mxu0
    %v439 = vadd.f32 0.0, %v438
    %v440 = vpop.f32.mrf.mxu0
    %441 = vmatprep.mubr.f32.mxu0 %v321
    %442 = vmatmul.mubr.f32.gmra.mxu0 %v320
    %v443 = vpop.f32.mrf.mxu0
    %v444 = vadd.f32 0.0, %v443
    %v445 = vpop.f32.mrf.mxu0
    %446 = vmatprep.mubr.f32.mxu0 %v323
    %447 = vmatmul.mubr.f32.gmra.mxu0 %v322
    %v448 = vpop.f32.mrf.mxu0
    %v449 = vadd.f32 0.0, %v448
    %v450 = vpop.f32.mrf.mxu0
    %451 = vmatprep.mubr.f32.mxu0 %v325
    %452 = vmatmul.mubr.f32.gmra.mxu0 %v324
    %v453 = vpop.f32.mrf.mxu0
    %v454 = vadd.f32 0.0, %v453
    %v455 = vpop.f32.mrf.mxu0
    %456 = vmatprep.mubr.f32.mxu0 %v327
    %457 = vmatmul.mubr.f32.gmra.mxu0 %v326
    %v458 = vpop.f32.mrf.mxu0
    %v459 = vadd.f32 0.0, %v458
    %v460 = vpop.f32.mrf.mxu0
    %461 = vmatprep.mubr.f32.mxu0 %v329
    %462 = vmatmul.mubr.f32.gmra.mxu0 %v328
    %v463 = vpop.f32.mrf.mxu0
    %v464 = vadd.f32 0.0, %v463
    %v465 = vpop.f32.mrf.mxu0
    %466 = vdwg.mxu0
    %467 = vst [vmem:[#allocation2] sm:$0xff] %v429
    %468 = vst [vmem:[#allocation2 + $0x8] sm:$0xff] %v434
    %469 = vst [vmem:[#allocation2 + $0x10] sm:$0xff] %v439
    %470 = vst [vmem:[#allocation2 + $0x18] sm:$0xff] %v444
    %471 = vst [vmem:[#allocation2 + $0x20] sm:$0xff] %v449
    %472 = vst [vmem:[#allocation2 + $0x28] sm:$0xff] %v454
    %473 = vst [vmem:[#allocation2 + $0x30] sm:$0xff] %v459
    %474 = vst [vmem:[#allocation2 + $0x38] sm:$0xff] %v464
    // Predicated region
    $region14: #{mmtg_input2emb.1} parent=1 // pred_check
      _
    $region15: #{mmtg_input2emb.1} parent=1 // pred_check_branch
      %476 = sbr.rel (0) target = $region17
    $region16: #{mmtg_input2emb.1} parent=1 // pred_region
      %s478 = ssub.s32 1024, 1024
      %479 = vsyncadd [#allocation3], %s478
      %s480 = sshll.u32 [#allocation2], 4
      %s481 = int_to_ptr.vmem [resolvable:$true] %s480
      %486 = dma.vmem_to_hbm [thread:$0]  %s481, 1024, %s3, [#allocation3], 128, 128, 8
    $region17: #{mmtg_input2emb.1} parent=1 // pred_fallthru
      _
    // Predicated region
    $region18: #{mmtg_input2emb.1} parent=1 // pred_check
      _
    $region19: #{mmtg_input2emb.1} parent=1 // pred_check_branch
      %488 = sbr.rel (0) target = $region21
    $region20: #{mmtg_input2emb.1} parent=1 // pred_region
      %489 = dma.done [#allocation3], 1024
    $region21: #{mmtg_input2emb.1} parent=1 // pred_fallthru
      _
    %490 = vsyncpa [#allocation3], 1

</llo_original>
